<compile_context>
chip_gen: v5e
topology: v5e:2x2
jax: 0.10.0
libtpu: 0.0.40
codegen_flags: <defaults>
</compile_context>

<pallas_src>
import jax
import jax.numpy as jnp
from jax.experimental import pallas as pl
from jax.experimental.pallas import tpu as pltpu


def _round_up(x, m):
    return ((x + m - 1) // m) * m


# ---------------------------------------------------------------------------
# Pallas kernels
# ---------------------------------------------------------------------------
def _conv_pool_kernel(p_ref, w_ref, b_ref, o_ref):
    """Fused Conv2d(valid, stride 1) + AvgPool2d(2,2).

    p_ref: (4, K, M)  window-grouped im2col patches. K = Cin*KH*KW (zero
                      padded), M = N*PH*PW (the POOLED output positions);
                      the leading axis holds the 4 taps of each 2x2 window.
    w_ref: (Cout, K)  conv weights flattened over (Cin, KH, KW), zero padded.
    b_ref: (Cout, 1)  bias column.
    o_ref: (Cout, M)  pooled conv output, lane-dense along M.
    """
    # Pooling is linear -> average the patches first (4x smaller matmul),
    # then a single MXU matmul + bias epilogue, all without leaving VMEM.
    pooled = (p_ref[0] + p_ref[1] + p_ref[2] + p_ref[3]) * 0.25      # (K, M)
    o_ref[...] = (
        jnp.dot(w_ref[...], pooled, preferred_element_type=jnp.float32)
        + b_ref[...]
    )


def _fc_stack_kernel(x_ref, w1_ref, b1_ref, w2_ref, b2_ref, w3_ref, b3_ref,
                     o_ref):
    """Fused Linear(400->120) -> Linear(120->84) -> Linear(84->10), no act."""
    h = (jnp.dot(x_ref[...], w1_ref[...], preferred_element_type=jnp.float32)
         + b1_ref[...])
    h = (jnp.dot(h, w2_ref[...], preferred_element_type=jnp.float32)
         + b2_ref[...])
    o_ref[...] = (jnp.dot(h, w3_ref[...], preferred_element_type=jnp.float32)
                  + b3_ref[...])


# ---------------------------------------------------------------------------
# Wrappers
# ---------------------------------------------------------------------------
def _grouped_pooled_patches(x, kh, kw, kpad):
    """im2col with output positions grouped by 2x2-pool window (XLA glue).

    x: (N, Cin, H, W) -> (4, kpad, N*PH*PW) float32 where entry
    [dh*2+dw, ci*kh*kw + i*kw + j, n*PH*PW + ph*PW + pw]
        = x[n, ci, 2*ph+dh+i, 2*pw+dw+j].
    """
    n, c, h, w = x.shape
    oh, ow = h - kh + 1, w - kw + 1
    ph, pw = oh // 2, ow // 2
    cols = []
    for i in range(kh):
        for j in range(kw):
            cols.append(x[:, :, i:i + oh, j:j + ow])
    p = jnp.stack(cols, axis=2)                   # (N, C, KH*KW, OH, OW)
    p = p.reshape(n, c, kh * kw, ph, 2, pw, 2)    # OH->(PH,2), OW->(PW,2)
    p = p.transpose(4, 6, 1, 2, 0, 3, 5)          # (dh, dw, C, KK, N, PH, PW)
    p = p.reshape(4, c * kh * kw, n * ph * pw)
    k = c * kh * kw
    if kpad > k:
        p = jnp.pad(p, ((0, 0), (0, kpad - k), (0, 0)))
    return p.astype(jnp.float32), ph, pw


def conv_pool_stage(x, w_mat, b_col, kh, kw):
    """x: (N,Cin,H,W), w_mat: (Cout,Kpad), b_col: (Cout,1).
    Returns ((Cout, N*PH*PW), PH, PW); columns ordered (n, ph, pw)."""
    cout, kpad = w_mat.shape
    patches, ph, pw = _grouped_pooled_patches(x, kh, kw, kpad)
    m = patches.shape[-1]
    out = pl.pallas_call(
        _conv_pool_kernel,
        out_shape=jax.ShapeDtypeStruct((cout, m), jnp.float32),
        grid=(1,),
        in_specs=[
            pl.BlockSpec((4, kpad, m), lambda i: (0, 0, 0)),
            pl.BlockSpec((cout, kpad), lambda i: (0, 0)),
            pl.BlockSpec((cout, 1), lambda i: (0, 0)),
        ],
        out_specs=pl.BlockSpec((cout, m), lambda i: (0, 0)),
        compiler_params=pltpu.CompilerParams(
            dimension_semantics=("arbitrary",)),
    )(patches, w_mat, b_col)
    return out, ph, pw


def fc_stack(x, w1t, b1, w2t, b2, w3t, b3):
    """Fused 3-layer MLP. x: (N, 400) -> (N, 10)."""
    n, d0 = x.shape
    d1, d2, d3 = w1t.shape[1], w2t.shape[1], w3t.shape[1]
    return pl.pallas_call(
        _fc_stack_kernel,
        out_shape=jax.ShapeDtypeStruct((n, d3), jnp.float32),
        grid=(1,),
        in_specs=[
            pl.BlockSpec((n, d0), lambda i: (0, 0)),
            pl.BlockSpec((d0, d1), lambda i: (0, 0)),
            pl.BlockSpec((1, d1), lambda i: (0, 0)),
            pl.BlockSpec((d1, d2), lambda i: (0, 0)),
            pl.BlockSpec((1, d2), lambda i: (0, 0)),
            pl.BlockSpec((d2, d3), lambda i: (0, 0)),
            pl.BlockSpec((1, d3), lambda i: (0, 0)),
        ],
        out_specs=pl.BlockSpec((n, d3), lambda i: (0, 0)),
        compiler_params=pltpu.CompilerParams(
            dimension_semantics=("arbitrary",)),
    )(x.astype(jnp.float32), w1t, b1, w2t, b2, w3t, b3)


# ---------------------------------------------------------------------------
# Parameters (PyTorch-style uniform(+-1/sqrt(fan_in)) init) + kernel layouts
# ---------------------------------------------------------------------------
def init_lenet_params(key):
    def u(key, shape, fan_in):
        bound = 1.0 / jnp.sqrt(fan_in)
        return jax.random.uniform(key, shape, jnp.float32, -bound, bound)

    keys = jax.random.split(key, 10)
    return {
        "conv1_w": u(keys[0], (6, 3, 5, 5), 3 * 5 * 5),
        "conv1_b": u(keys[1], (6,), 3 * 5 * 5),
        "conv2_w": u(keys[2], (16, 6, 5, 5), 6 * 5 * 5),
        "conv2_b": u(keys[3], (16,), 6 * 5 * 5),
        "fc1_w": u(keys[4], (120, 400), 400),
        "fc1_b": u(keys[5], (120,), 400),
        "fc2_w": u(keys[6], (84, 120), 120),
        "fc2_b": u(keys[7], (84,), 120),
        "fc3_w": u(keys[8], (10, 84), 84),
        "fc3_b": u(keys[9], (10,), 84),
    }


def prepare_params(params):
    """Precompute kernel-friendly layouts once (off the forward hot path)."""
    def conv_layout(w, b):
        cout, cin, kh, kw = w.shape
        k = cin * kh * kw
        kpad = _round_up(k, 8)                      # unmasked sublane loads
        wmat = jnp.pad(w.reshape(cout, k), ((0, 0), (0, kpad - k)))
        return wmat.astype(jnp.float32), b.reshape(cout, 1).astype(jnp.float32)

    c1w, c1b = conv_layout(params["conv1_w"], params["conv1_b"])
    c2w, c2b = conv_layout(params["conv2_w"], params["conv2_b"])
    return {
        "conv1_wmat": c1w, "conv1_bcol": c1b,
        "conv2_wmat": c2w, "conv2_bcol": c2b,
        "fc1_wt": params["fc1_w"].T.astype(jnp.float32),
        "fc1_b": params["fc1_b"].reshape(1, -1).astype(jnp.float32),
        "fc2_wt": params["fc2_w"].T.astype(jnp.float32),
        "fc2_b": params["fc2_b"].reshape(1, -1).astype(jnp.float32),
        "fc3_wt": params["fc3_w"].T.astype(jnp.float32),
        "fc3_b": params["fc3_b"].reshape(1, -1).astype(jnp.float32),
    }


# ---------------------------------------------------------------------------
# Forward pass (3 pallas_calls)
# ---------------------------------------------------------------------------
def lenet_forward(prepared, x):
    n = x.shape[0]
    # conv stage 1: Conv2d(3->6, 5) + AvgPool2d(2,2), fused
    y1, ph1, pw1 = conv_pool_stage(x, prepared["conv1_wmat"],
                                   prepared["conv1_bcol"], 5, 5)
    c1 = y1.shape[0]
    # (C1, N*PH*PW) -> NCHW activation for the stage-2 patch build
    x2 = y1.reshape(c1, n, ph1, pw1).transpose(1, 0, 2, 3)
    # conv stage 2: Conv2d(6->16, 5) + AvgPool2d(2,2), fused
    y2, ph2, pw2 = conv_pool_stage(x2, prepared["conv2_wmat"],
                                   prepared["conv2_bcol"], 5, 5)
    c2 = y2.shape[0]
    # flatten per sample in (C, H, W) order (matches torch .view(N, -1))
    xfc = (y2.reshape(c2, n, ph2 * pw2).transpose(1, 0, 2)
             .reshape(n, c2 * ph2 * pw2))
    # fused FC stack: 400 -> 120 -> 84 -> 10 (no activations, as in the spec)
    return fc_stack(xfc,
                    prepared["fc1_wt"], prepared["fc1_b"],
                    prepared["fc2_wt"], prepared["fc2_b"],
                    prepared["fc3_wt"], prepared["fc3_b"])


# ---------------------------------------------------------------------------
# Pure-JAX reference (for correctness check only)
# ---------------------------------------------------------------------------
def lenet_reference(params, x):
    hp = jax.lax.Precision.HIGHEST

    def conv(x, w, b):
        y = jax.lax.conv_general_dilated(
            x, w, window_strides=(1, 1), padding="VALID",
            dimension_numbers=("NCHW", "OIHW", "NCHW"), precision=hp)
        return y + b.reshape(1, -1, 1, 1)

    def pool(x):
        n, c, h, w = x.shape
        return x.reshape(n, c, h // 2, 2, w // 2, 2).mean(axis=(3, 5))

    x = pool(conv(x, params["conv1_w"], params["conv1_b"]))
    x = pool(conv(x, params["conv2_w"], params["conv2_b"]))
    x = x.reshape(x.shape[0], -1)
    x = jnp.dot(x, params["fc1_w"].T, precision=hp) + params["fc1_b"]
    x = jnp.dot(x, params["fc2_w"].T, precision=hp) + params["fc2_b"]
    x = jnp.dot(x, params["fc3_w"].T, precision=hp) + params["fc3_b"]
    return x


if __name__ == "__main__":
    key = jax.random.PRNGKey(0)
    key_x, key_p = jax.random.split(key)
    # LeNet's FC stack requires 16*5*5 = 400 features => 3x32x32 input.
    x = jax.random.normal(key_x, (2, 3, 32, 32), dtype=jnp.float32)
    params = init_lenet_params(key_p)
    prepared = prepare_params(params)

    fwd = jax.jit(lenet_forward)
    out = jax.block_until_ready(fwd(prepared, x))
    assert out.shape == (2, 10) and out.dtype == jnp.float32

    ref = jax.block_until_ready(lenet_reference(params, x))
    assert bool(jnp.allclose(out, ref, rtol=1e-3, atol=1e-3))
    print("KERNEL_OK")
</pallas_src>

<mosaic_0001>
module attributes {stable_mosaic.version = 11 : i64} {
  func.func @_conv_pool_kernel(%arg0: i32, %arg1: memref<4x80x392xf32, #tpu.memory_space<vmem>>, %arg2: memref<6x80xf32, #tpu.memory_space<vmem>>, %arg3: memref<6x1xf32, #tpu.memory_space<vmem>>, %arg4: memref<6x392xf32, #tpu.memory_space<vmem>>) attributes {dimension_semantics = [#tpu.dimension_semantics<arbitrary>], iteration_bounds = array<i64: 1>, scalar_prefetch = 0 : i64, scratch_operands = 0 : i64, tpu.core_type = #tpu.core_type<tc>, window_params = [{pipeline_mode = #tpu.pipeline_mode<synchronous>, transform_indices = @transform_0, window_bounds = array<i64: 4, 80, 392>}, {pipeline_mode = #tpu.pipeline_mode<synchronous>, transform_indices = @transform_1, window_bounds = array<i64: 6, 80>}, {pipeline_mode = #tpu.pipeline_mode<synchronous>, transform_indices = @transform_2, window_bounds = array<i64: 6, 1>}, {pipeline_mode = #tpu.pipeline_mode<synchronous>, transform_indices = @transform_3, window_bounds = array<i64: 6, 392>}]} {
    %c0 = arith.constant 0 : index
    %c0_0 = arith.constant 0 : index
    %c0_1 = arith.constant 0 : index
    %0 = vector.load %arg1[%c0, %c0_0, %c0_1] : memref<4x80x392xf32, #tpu.memory_space<vmem>>, vector<1x80x392xf32>
    %1 = vector.shape_cast %0 : vector<1x80x392xf32> to vector<80x392xf32>
    %c1 = arith.constant 1 : index
    %c0_2 = arith.constant 0 : index
    %c0_3 = arith.constant 0 : index
    %2 = vector.load %arg1[%c1, %c0_2, %c0_3] : memref<4x80x392xf32, #tpu.memory_space<vmem>>, vector<1x80x392xf32>
    %3 = vector.shape_cast %2 : vector<1x80x392xf32> to vector<80x392xf32>
    %4 = arith.addf %1, %3 : vector<80x392xf32>
    %c2 = arith.constant 2 : index
    %c0_4 = arith.constant 0 : index
    %c0_5 = arith.constant 0 : index
    %5 = vector.load %arg1[%c2, %c0_4, %c0_5] : memref<4x80x392xf32, #tpu.memory_space<vmem>>, vector<1x80x392xf32>
    %6 = vector.shape_cast %5 : vector<1x80x392xf32> to vector<80x392xf32>
    %7 = arith.addf %4, %6 : vector<80x392xf32>
    %c3 = arith.constant 3 : index
    %c0_6 = arith.constant 0 : index
    %c0_7 = arith.constant 0 : index
    %8 = vector.load %arg1[%c3, %c0_6, %c0_7] : memref<4x80x392xf32, #tpu.memory_space<vmem>>, vector<1x80x392xf32>
    %9 = vector.shape_cast %8 : vector<1x80x392xf32> to vector<80x392xf32>
    %10 = arith.addf %7, %9 : vector<80x392xf32>
    %cst = arith.constant 2.500000e-01 : f32
    %11 = vector.broadcast %cst : f32 to vector<80x392xf32>
    %12 = arith.mulf %10, %11 : vector<80x392xf32>
    %c0_8 = arith.constant 0 : index
    %c0_9 = arith.constant 0 : index
    %13 = vector.load %arg2[%c0_8, %c0_9] : memref<6x80xf32, #tpu.memory_space<vmem>>, vector<6x80xf32>
    %cst_10 = arith.constant dense<0.000000e+00> : vector<6x392xf32>
    %14 = tpu.matmul %13, %12, %cst_10 {dimension_numbers = #tpu.dot_dimension_numbers<[1], [0], [0], [1], [0, 0, 1, 1], [], []>} : vector<6x80xf32>, vector<80x392xf32>, vector<6x392xf32> -> vector<6x392xf32>
    %c0_11 = arith.constant 0 : index
    %c0_12 = arith.constant 0 : index
    %15 = vector.load %arg3[%c0_11, %c0_12] : memref<6x1xf32, #tpu.memory_space<vmem>>, vector<6x1xf32>
    %16 = vector.broadcast %15 : vector<6x1xf32> to vector<6x392xf32>
    %17 = arith.addf %14, %16 : vector<6x392xf32>
    %c0_13 = arith.constant 0 : index
    %c0_14 = arith.constant 0 : index
    %18 = vector.load %arg4[%c0_13, %c0_14] : memref<6x392xf32, #tpu.memory_space<vmem>>, vector<6x392xf32>
    tpu.vector_store %arg4[%c0_13, %c0_14], %17 {strides = array<i32>} : memref<6x392xf32, #tpu.memory_space<vmem>>, vector<6x392xf32>,
    return
  }
  func.func @transform_0(%arg0: i32) -> (i32, i32, i32) {
    %c0_i32 = arith.constant 0 : i32
    %c0_i32_0 = arith.constant 0 : i32
    %c0_i32_1 = arith.constant 0 : i32
    %c0_i32_2 = arith.constant 0 : i32
    return %c0_i32, %c0_i32_0, %c0_i32_1 : i32, i32, i32
  }
  func.func @transform_1(%arg0: i32) -> (i32, i32) {
    %c0_i32 = arith.constant 0 : i32
    %c0_i32_0 = arith.constant 0 : i32
    %c0_i32_1 = arith.constant 0 : i32
    return %c0_i32, %c0_i32_0 : i32, i32
  }
  func.func @transform_2(%arg0: i32) -> (i32, i32) {
    %c0_i32 = arith.constant 0 : i32
    %c0_i32_0 = arith.constant 0 : i32
    %c0_i32_1 = arith.constant 0 : i32
    return %c0_i32, %c0_i32_0 : i32, i32
  }
  func.func @transform_3(%arg0: i32) -> (i32, i32) {
    %c0_i32 = arith.constant 0 : i32
    %c0_i32_0 = arith.constant 0 : i32
    %c0_i32_1 = arith.constant 0 : i32
    return %c0_i32, %c0_i32_0 : i32, i32
  }
}

module attributes {stable_mosaic.version = 11 : i64} {
  func.func @_conv_pool_kernel(%arg0: i32, %arg1: memref<4x152x50xf32, #tpu.memory_space<vmem>>, %arg2: memref<16x152xf32, #tpu.memory_space<vmem>>, %arg3: memref<16x1xf32, #tpu.memory_space<vmem>>, %arg4: memref<16x50xf32, #tpu.memory_space<vmem>>) attributes {dimension_semantics = [#tpu.dimension_semantics<arbitrary>], iteration_bounds = array<i64: 1>, scalar_prefetch = 0 : i64, scratch_operands = 0 : i64, tpu.core_type = #tpu.core_type<tc>, window_params = [{pipeline_mode = #tpu.pipeline_mode<synchronous>, transform_indices = @transform_0, window_bounds = array<i64: 4, 152, 50>}, {pipeline_mode = #tpu.pipeline_mode<synchronous>, transform_indices = @transform_1, window_bounds = array<i64: 16, 152>}, {pipeline_mode = #tpu.pipeline_mode<synchronous>, transform_indices = @transform_2, window_bounds = array<i64: 16, 1>}, {pipeline_mode = #tpu.pipeline_mode<synchronous>, transform_indices = @transform_3, window_bounds = array<i64: 16, 50>}]} {
    %c0 = arith.constant 0 : index
    %c0_0 = arith.constant 0 : index
    %c0_1 = arith.constant 0 : index
    %0 = vector.load %arg1[%c0, %c0_0, %c0_1] : memref<4x152x50xf32, #tpu.memory_space<vmem>>, vector<1x152x50xf32>
    %1 = vector.shape_cast %0 : vector<1x152x50xf32> to vector<152x50xf32>
    %c1 = arith.constant 1 : index
    %c0_2 = arith.constant 0 : index
    %c0_3 = arith.constant 0 : index
    %2 = vector.load %arg1[%c1, %c0_2, %c0_3] : memref<4x152x50xf32, #tpu.memory_space<vmem>>, vector<1x152x50xf32>
    %3 = vector.shape_cast %2 : vector<1x152x50xf32> to vector<152x50xf32>
    %4 = arith.addf %1, %3 : vector<152x50xf32>
    %c2 = arith.constant 2 : index
    %c0_4 = arith.constant 0 : index
    %c0_5 = arith.constant 0 : index
    %5 = vector.load %arg1[%c2, %c0_4, %c0_5] : memref<4x152x50xf32, #tpu.memory_space<vmem>>, vector<1x152x50xf32>
    %6 = vector.shape_cast %5 : vector<1x152x50xf32> to vector<152x50xf32>
    %7 = arith.addf %4, %6 : vector<152x50xf32>
    %c3 = arith.constant 3 : index
    %c0_6 = arith.constant 0 : index
    %c0_7 = arith.constant 0 : index
    %8 = vector.load %arg1[%c3, %c0_6, %c0_7] : memref<4x152x50xf32, #tpu.memory_space<vmem>>, vector<1x152x50xf32>
    %9 = vector.shape_cast %8 : vector<1x152x50xf32> to vector<152x50xf32>
    %10 = arith.addf %7, %9 : vector<152x50xf32>
    %cst = arith.constant 2.500000e-01 : f32
    %11 = vector.broadcast %cst : f32 to vector<152x50xf32>
    %12 = arith.mulf %10, %11 : vector<152x50xf32>
    %c0_8 = arith.constant 0 : index
    %c0_9 = arith.constant 0 : index
    %13 = vector.load %arg2[%c0_8, %c0_9] : memref<16x152xf32, #tpu.memory_space<vmem>>, vector<16x152xf32>
    %cst_10 = arith.constant dense<0.000000e+00> : vector<16x50xf32>
    %14 = tpu.matmul %13, %12, %cst_10 {dimension_numbers = #tpu.dot_dimension_numbers<[1], [0], [0], [1], [0, 0, 1, 1], [], []>} : vector<16x152xf32>, vector<152x50xf32>, vector<16x50xf32> -> vector<16x50xf32>
    %c0_11 = arith.constant 0 : index
    %c0_12 = arith.constant 0 : index
    %15 = vector.load %arg3[%c0_11, %c0_12] : memref<16x1xf32, #tpu.memory_space<vmem>>, vector<16x1xf32>
    %16 = vector.broadcast %15 : vector<16x1xf32> to vector<16x50xf32>
    %17 = arith.addf %14, %16 : vector<16x50xf32>
    %c0_13 = arith.constant 0 : index
    %c0_14 = arith.constant 0 : index
    %18 = vector.load %arg4[%c0_13, %c0_14] : memref<16x50xf32, #tpu.memory_space<vmem>>, vector<16x50xf32>
    tpu.vector_store %arg4[%c0_13, %c0_14], %17 {strides = array<i32>} : memref<16x50xf32, #tpu.memory_space<vmem>>, vector<16x50xf32>,
    return
  }
  func.func @transform_0(%arg0: i32) -> (i32, i32, i32) {
    %c0_i32 = arith.constant 0 : i32
    %c0_i32_0 = arith.constant 0 : i32
    %c0_i32_1 = arith.constant 0 : i32
    %c0_i32_2 = arith.constant 0 : i32
    return %c0_i32, %c0_i32_0, %c0_i32_1 : i32, i32, i32
  }
  func.func @transform_1(%arg0: i32) -> (i32, i32) {
    %c0_i32 = arith.constant 0 : i32
    %c0_i32_0 = arith.constant 0 : i32
    %c0_i32_1 = arith.constant 0 : i32
    return %c0_i32, %c0_i32_0 : i32, i32
  }
  func.func @transform_2(%arg0: i32) -> (i32, i32) {
    %c0_i32 = arith.constant 0 : i32
    %c0_i32_0 = arith.constant 0 : i32
    %c0_i32_1 = arith.constant 0 : i32
    return %c0_i32, %c0_i32_0 : i32, i32
  }
  func.func @transform_3(%arg0: i32) -> (i32, i32) {
    %c0_i32 = arith.constant 0 : i32
    %c0_i32_0 = arith.constant 0 : i32
    %c0_i32_1 = arith.constant 0 : i32
    return %c0_i32, %c0_i32_0 : i32, i32
  }
}

module attributes {stable_mosaic.version = 11 : i64} {
  func.func @_fc_stack_kernel(%arg0: i32, %arg1: memref<2x400xf32, #tpu.memory_space<vmem>>, %arg2: memref<400x120xf32, #tpu.memory_space<vmem>>, %arg3: memref<1x120xf32, #tpu.memory_space<vmem>>, %arg4: memref<120x84xf32, #tpu.memory_space<vmem>>, %arg5: memref<1x84xf32, #tpu.memory_space<vmem>>, %arg6: memref<84x10xf32, #tpu.memory_space<vmem>>, %arg7: memref<1x10xf32, #tpu.memory_space<vmem>>, %arg8: memref<2x10xf32, #tpu.memory_space<vmem>>) attributes {dimension_semantics = [#tpu.dimension_semantics<arbitrary>], iteration_bounds = array<i64: 1>, scalar_prefetch = 0 : i64, scratch_operands = 0 : i64, tpu.core_type = #tpu.core_type<tc>, window_params = [{pipeline_mode = #tpu.pipeline_mode<synchronous>, transform_indices = @transform_0, window_bounds = array<i64: 2, 400>}, {pipeline_mode = #tpu.pipeline_mode<synchronous>, transform_indices = @transform_1, window_bounds = array<i64: 400, 120>}, {pipeline_mode = #tpu.pipeline_mode<synchronous>, transform_indices = @transform_2, window_bounds = array<i64: 1, 120>}, {pipeline_mode = #tpu.pipeline_mode<synchronous>, transform_indices = @transform_3, window_bounds = array<i64: 120, 84>}, {pipeline_mode = #tpu.pipeline_mode<synchronous>, transform_indices = @transform_4, window_bounds = array<i64: 1, 84>}, {pipeline_mode = #tpu.pipeline_mode<synchronous>, transform_indices = @transform_5, window_bounds = array<i64: 84, 10>}, {pipeline_mode = #tpu.pipeline_mode<synchronous>, transform_indices = @transform_6, window_bounds = array<i64: 1, 10>}, {pipeline_mode = #tpu.pipeline_mode<synchronous>, transform_indices = @transform_7, window_bounds = array<i64: 2, 10>}]} {
    %c0 = arith.constant 0 : index
    %c0_0 = arith.constant 0 : index
    %0 = vector.load %arg1[%c0, %c0_0] : memref<2x400xf32, #tpu.memory_space<vmem>>, vector<2x400xf32>
    %c0_1 = arith.constant 0 : index
    %c0_2 = arith.constant 0 : index
    %1 = vector.load %arg2[%c0_1, %c0_2] : memref<400x120xf32, #tpu.memory_space<vmem>>, vector<400x120xf32>
    %cst = arith.constant dense<0.000000e+00> : vector<2x120xf32>
    %2 = tpu.matmul %0, %1, %cst {dimension_numbers = #tpu.dot_dimension_numbers<[1], [0], [0], [1], [0, 0, 1, 1], [], []>} : vector<2x400xf32>, vector<400x120xf32>, vector<2x120xf32> -> vector<2x120xf32>
    %c0_3 = arith.constant 0 : index
    %c0_4 = arith.constant 0 : index
    %3 = vector.load %arg3[%c0_3, %c0_4] : memref<1x120xf32, #tpu.memory_space<vmem>>, vector<1x120xf32>
    %4 = vector.broadcast %3 : vector<1x120xf32> to vector<2x120xf32>
    %5 = arith.addf %2, %4 : vector<2x120xf32>
    %c0_5 = arith.constant 0 : index
    %c0_6 = arith.constant 0 : index
    %6 = vector.load %arg4[%c0_5, %c0_6] : memref<120x84xf32, #tpu.memory_space<vmem>>, vector<120x84xf32>
    %cst_7 = arith.constant dense<0.000000e+00> : vector<2x84xf32>
    %7 = tpu.matmul %5, %6, %cst_7 {dimension_numbers = #tpu.dot_dimension_numbers<[1], [0], [0], [1], [0, 0, 1, 1], [], []>} : vector<2x120xf32>, vector<120x84xf32>, vector<2x84xf32> -> vector<2x84xf32>
    %c0_8 = arith.constant 0 : index
    %c0_9 = arith.constant 0 : index
    %8 = vector.load %arg5[%c0_8, %c0_9] : memref<1x84xf32, #tpu.memory_space<vmem>>, vector<1x84xf32>
    %9 = vector.broadcast %8 : vector<1x84xf32> to vector<2x84xf32>
    %10 = arith.addf %7, %9 : vector<2x84xf32>
    %c0_10 = arith.constant 0 : index
    %c0_11 = arith.constant 0 : index
    %11 = vector.load %arg6[%c0_10, %c0_11] : memref<84x10xf32, #tpu.memory_space<vmem>>, vector<84x10xf32>
    %cst_12 = arith.constant dense<0.000000e+00> : vector<2x10xf32>
    %12 = tpu.matmul %10, %11, %cst_12 {dimension_numbers = #tpu.dot_dimension_numbers<[1], [0], [0], [1], [0, 0, 1, 1], [], []>} : vector<2x84xf32>, vector<84x10xf32>, vector<2x10xf32> -> vector<2x10xf32>
    %c0_13 = arith.constant 0 : index
    %c0_14 = arith.constant 0 : index
    %13 = vector.load %arg7[%c0_13, %c0_14] : memref<1x10xf32, #tpu.memory_space<vmem>>, vector<1x10xf32>
    %14 = vector.broadcast %13 : vector<1x10xf32> to vector<2x10xf32>
    %15 = arith.addf %12, %14 : vector<2x10xf32>
    %c0_15 = arith.constant 0 : index
    %c0_16 = arith.constant 0 : index
    %16 = vector.load %arg8[%c0_15, %c0_16] : memref<2x10xf32, #tpu.memory_space<vmem>>, vector<2x10xf32>
    tpu.vector_store %arg8[%c0_15, %c0_16], %15 {strides = array<i32>} : memref<2x10xf32, #tpu.memory_space<vmem>>, vector<2x10xf32>,
    return
  }
  func.func @transform_0(%arg0: i32) -> (i32, i32) {
    %c0_i32 = arith.constant 0 : i32
    %c0_i32_0 = arith.constant 0 : i32
    %c0_i32_1 = arith.constant 0 : i32
    return %c0_i32, %c0_i32_0 : i32, i32
  }
  func.func @transform_1(%arg0: i32) -> (i32, i32) {
    %c0_i32 = arith.constant 0 : i32
    %c0_i32_0 = arith.constant 0 : i32
    %c0_i32_1 = arith.constant 0 : i32
    return %c0_i32, %c0_i32_0 : i32, i32
  }
  func.func @transform_2(%arg0: i32) -> (i32, i32) {
    %c0_i32 = arith.constant 0 : i32
    %c0_i32_0 = arith.constant 0 : i32
    %c0_i32_1 = arith.constant 0 : i32
    return %c0_i32, %c0_i32_0 : i32, i32
  }
  func.func @transform_3(%arg0: i32) -> (i32, i32) {
    %c0_i32 = arith.constant 0 : i32
    %c0_i32_0 = arith.constant 0 : i32
    %c0_i32_1 = arith.constant 0 : i32
    return %c0_i32, %c0_i32_0 : i32, i32
  }
  func.func @transform_4(%arg0: i32) -> (i32, i32) {
    %c0_i32 = arith.constant 0 : i32
    %c0_i32_0 = arith.constant 0 : i32
    %c0_i32_1 = arith.constant 0 : i32
    return %c0_i32, %c0_i32_0 : i32, i32
  }
  func.func @transform_5(%arg0: i32) -> (i32, i32) {
    %c0_i32 = arith.constant 0 : i32
    %c0_i32_0 = arith.constant 0 : i32
    %c0_i32_1 = arith.constant 0 : i32
    return %c0_i32, %c0_i32_0 : i32, i32
  }
  func.func @transform_6(%arg0: i32) -> (i32, i32) {
    %c0_i32 = arith.constant 0 : i32
    %c0_i32_0 = arith.constant 0 : i32
    %c0_i32_1 = arith.constant 0 : i32
    return %c0_i32, %c0_i32_0 : i32, i32
  }
  func.func @transform_7(%arg0: i32) -> (i32, i32) {
    %c0_i32 = arith.constant 0 : i32
    %c0_i32_0 = arith.constant 0 : i32
    %c0_i32_1 = arith.constant 0 : i32
    return %c0_i32, %c0_i32_0 : i32, i32
  }
}

</mosaic_0001>

<llo_original>
// kernel: lenet_forward.3
$region0: #{lenet_forward.3}
  #allocation0 [shape = 'u32[]', space=smem, size = 0x4, offset = 0x4, fixed_abs, tag = 'smem constant byte address 0x4 - core index']
  #allocation1 [shape = 'u32[72,128]{1,0:T(1,128)}', space=vmem, size = 0x9000, scoped, tag = 'internal scratch']
  %s0 = inlined_call_operand.vmem [shape: f32[4,80,392], index: 0, kind: input, shape index: {}]
  %s1 = inlined_call_operand.vmem [shape: f32[6,80], index: 1, kind: input, shape index: {}]
  %s2 = inlined_call_operand.vmem [shape: f32[6,1], index: 2, kind: input, shape index: {}]
  %s3 = inlined_call_operand.vmem [shape: f32[6,392], index: 3, kind: output, shape index: {}]
  %s4 = sld [smem:[#allocation0]]
  $region22: #{lenet_forward.3} parent=0
    _
  %s6 = ssub.s32 1, %s4
  %s7 = scalar_select 0, %s6, %s4
  // Predicated region
  $region2: #{lenet_forward.3} parent=0 // pred_check
    _
  $region3: #{lenet_forward.3} parent=0 // pred_check_branch
    %9 = sbr.rel (0) target = $region5
  $region4: #{lenet_forward.3} parent=0 // pred_region
    _
  $region5: #{lenet_forward.3} parent=0 // pred_fallthru
    _
  // Predicated region
  $region6: #{lenet_forward.3} parent=0 // pred_check
    _
  $region7: #{lenet_forward.3} parent=0 // pred_check_branch
    %11 = sbr.rel (0) target = $region9
  $region8: #{lenet_forward.3} parent=0 // pred_region
    _
  $region9: #{lenet_forward.3} parent=0 // pred_fallthru
    _
  // Predicated region
  $region10: #{lenet_forward.3} parent=0 // pred_check
    _
  $region11: #{lenet_forward.3} parent=0 // pred_check_branch
    %13 = sbr.rel (0) target = $region13
  $region12: #{lenet_forward.3} parent=0 // pred_region
    _
  $region13: #{lenet_forward.3} parent=0 // pred_fallthru
    _
  %v14 = vld [vmem:[%s0] sm:$0xff]
  %v15 = vld [vmem:[%s0 + $0x8] sm:$0xff]
  %v16 = vld [vmem:[%s0 + $0x10] sm:$0xff]
  %v17 = vld [vmem:[%s0 + $0x18] sm:$0xff]
  %v18 = vld [vmem:[%s0 + $0x20] sm:$0xff]
  %v19 = vld [vmem:[%s0 + $0x28] sm:$0xff]
  %v20 = vld [vmem:[%s0 + $0x30] sm:$0xff]
  %v21 = vld [vmem:[%s0 + $0x38] sm:$0xff]
  %v22 = vld [vmem:[%s0 + $0x40] sm:$0xff]
  %v23 = vld [vmem:[%s0 + $0x48] sm:$0xff]
  %v24 = vld [vmem:[%s0 + $0x50] sm:$0xff]
  %v25 = vld [vmem:[%s0 + $0x58] sm:$0xff]
  %v26 = vld [vmem:[%s0 + $0x60] sm:$0xff]
  %v27 = vld [vmem:[%s0 + $0x68] sm:$0xff]
  %v28 = vld [vmem:[%s0 + $0x70] sm:$0xff]
  %v29 = vld [vmem:[%s0 + $0x78] sm:$0xff]
  %v30 = vld [vmem:[%s0 + $0x80] sm:$0xff]
  %v31 = vld [vmem:[%s0 + $0x88] sm:$0xff]
  %v32 = vld [vmem:[%s0 + $0x90] sm:$0xff]
  %v33 = vld [vmem:[%s0 + $0x98] sm:$0xff]
  %v34 = vld [vmem:[%s0 + $0xa0] sm:$0xff]
  %v35 = vld [vmem:[%s0 + $0xa8] sm:$0xff]
  %v36 = vld [vmem:[%s0 + $0xb0] sm:$0xff]
  %v37 = vld [vmem:[%s0 + $0xb8] sm:$0xff]
  %v38 = vld [vmem:[%s0 + $0xc0] sm:$0xff]
  %v39 = vld [vmem:[%s0 + $0xc8] sm:$0xff]
  %v40 = vld [vmem:[%s0 + $0xd0] sm:$0xff]
  %v41 = vld [vmem:[%s0 + $0xd8] sm:$0xff]
  %v42 = vld [vmem:[%s0 + $0xe0] sm:$0xff]
  %v43 = vld [vmem:[%s0 + $0xe8] sm:$0xff]
  %v44 = vld [vmem:[%s0 + $0xf0] sm:$0xff]
  %v45 = vld [vmem:[%s0 + $0xf8] sm:$0xff]
  %v46 = vld [vmem:[%s0 + $0x100] sm:$0xff]
  %v47 = vld [vmem:[%s0 + $0x108] sm:$0xff]
  %v48 = vld [vmem:[%s0 + $0x110] sm:$0xff]
  %v49 = vld [vmem:[%s0 + $0x118] sm:$0xff]
  %v50 = vld [vmem:[%s0 + $0x120] sm:$0xff]
  %v51 = vld [vmem:[%s0 + $0x128] sm:$0xff]
  %v52 = vld [vmem:[%s0 + $0x130] sm:$0xff]
  %v53 = vld [vmem:[%s0 + $0x138] sm:$0xff]
  %s54 = scalar_lea.vmem %s0, 320
  %v55 = vld [vmem:[%s54] sm:$0xff]
  %v56 = vld [vmem:[%s54 + $0x8] sm:$0xff]
  %v57 = vld [vmem:[%s54 + $0x10] sm:$0xff]
  %v58 = vld [vmem:[%s54 + $0x18] sm:$0xff]
  %v59 = vld [vmem:[%s54 + $0x20] sm:$0xff]
  %v60 = vld [vmem:[%s54 + $0x28] sm:$0xff]
  %v61 = vld [vmem:[%s54 + $0x30] sm:$0xff]
  %v62 = vld [vmem:[%s54 + $0x38] sm:$0xff]
  %v63 = vld [vmem:[%s54 + $0x40] sm:$0xff]
  %v64 = vld [vmem:[%s54 + $0x48] sm:$0xff]
  %v65 = vld [vmem:[%s54 + $0x50] sm:$0xff]
  %v66 = vld [vmem:[%s54 + $0x58] sm:$0xff]
  %v67 = vld [vmem:[%s54 + $0x60] sm:$0xff]
  %v68 = vld [vmem:[%s54 + $0x68] sm:$0xff]
  %v69 = vld [vmem:[%s54 + $0x70] sm:$0xff]
  %v70 = vld [vmem:[%s54 + $0x78] sm:$0xff]
  %v71 = vld [vmem:[%s54 + $0x80] sm:$0xff]
  %v72 = vld [vmem:[%s54 + $0x88] sm:$0xff]
  %v73 = vld [vmem:[%s54 + $0x90] sm:$0xff]
  %v74 = vld [vmem:[%s54 + $0x98] sm:$0xff]
  %v75 = vld [vmem:[%s54 + $0xa0] sm:$0xff]
  %v76 = vld [vmem:[%s54 + $0xa8] sm:$0xff]
  %v77 = vld [vmem:[%s54 + $0xb0] sm:$0xff]
  %v78 = vld [vmem:[%s54 + $0xb8] sm:$0xff]
  %v79 = vld [vmem:[%s54 + $0xc0] sm:$0xff]
  %v80 = vld [vmem:[%s54 + $0xc8] sm:$0xff]
  %v81 = vld [vmem:[%s54 + $0xd0] sm:$0xff]
  %v82 = vld [vmem:[%s54 + $0xd8] sm:$0xff]
  %v83 = vld [vmem:[%s54 + $0xe0] sm:$0xff]
  %v84 = vld [vmem:[%s54 + $0xe8] sm:$0xff]
  %v85 = vld [vmem:[%s54 + $0xf0] sm:$0xff]
  %v86 = vld [vmem:[%s54 + $0xf8] sm:$0xff]
  %v87 = vld [vmem:[%s54 + $0x100] sm:$0xff]
  %v88 = vld [vmem:[%s54 + $0x108] sm:$0xff]
  %v89 = vld [vmem:[%s54 + $0x110] sm:$0xff]
  %v90 = vld [vmem:[%s54 + $0x118] sm:$0xff]
  %v91 = vld [vmem:[%s54 + $0x120] sm:$0xff]
  %v92 = vld [vmem:[%s54 + $0x128] sm:$0xff]
  %v93 = vld [vmem:[%s54 + $0x130] sm:$0xff]
  %v94 = vld [vmem:[%s54 + $0x138] sm:$0xff]
  %v95 = vadd.f32 %v14, %v55
  %v96 = vadd.f32 %v15, %v56
  %v97 = vadd.f32 %v16, %v57
  %v98 = vadd.f32 %v17, %v58
  %v99 = vadd.f32 %v18, %v59
  %v100 = vadd.f32 %v19, %v60
  %v101 = vadd.f32 %v20, %v61
  %v102 = vadd.f32 %v21, %v62
  %v103 = vadd.f32 %v22, %v63
  %v104 = vadd.f32 %v23, %v64
  %v105 = vadd.f32 %v24, %v65
  %v106 = vadd.f32 %v25, %v66
  %v107 = vadd.f32 %v26, %v67
  %v108 = vadd.f32 %v27, %v68
  %v109 = vadd.f32 %v28, %v69
  %v110 = vadd.f32 %v29, %v70
  %v111 = vadd.f32 %v30, %v71
  %v112 = vadd.f32 %v31, %v72
  %v113 = vadd.f32 %v32, %v73
  %v114 = vadd.f32 %v33, %v74
  %v115 = vadd.f32 %v34, %v75
  %v116 = vadd.f32 %v35, %v76
  %v117 = vadd.f32 %v36, %v77
  %v118 = vadd.f32 %v37, %v78
  %v119 = vadd.f32 %v38, %v79
  %v120 = vadd.f32 %v39, %v80
  %v121 = vadd.f32 %v40, %v81
  %v122 = vadd.f32 %v41, %v82
  %v123 = vadd.f32 %v42, %v83
  %v124 = vadd.f32 %v43, %v84
  %v125 = vadd.f32 %v44, %v85
  %v126 = vadd.f32 %v45, %v86
  %v127 = vadd.f32 %v46, %v87
  %v128 = vadd.f32 %v47, %v88
  %v129 = vadd.f32 %v48, %v89
  %v130 = vadd.f32 %v49, %v90
  %v131 = vadd.f32 %v50, %v91
  %v132 = vadd.f32 %v51, %v92
  %v133 = vadd.f32 %v52, %v93
  %v134 = vadd.f32 %v53, %v94
  %s135 = scalar_lea.vmem %s0, 640
  %v136 = vld [vmem:[%s135] sm:$0xff]
  %v137 = vld [vmem:[%s135 + $0x8] sm:$0xff]
  %v138 = vld [vmem:[%s135 + $0x10] sm:$0xff]
  %v139 = vld [vmem:[%s135 + $0x18] sm:$0xff]
  %v140 = vld [vmem:[%s135 + $0x20] sm:$0xff]
  %v141 = vld [vmem:[%s135 + $0x28] sm:$0xff]
  %v142 = vld [vmem:[%s135 + $0x30] sm:$0xff]
  %v143 = vld [vmem:[%s135 + $0x38] sm:$0xff]
  %v144 = vld [vmem:[%s135 + $0x40] sm:$0xff]
  %v145 = vld [vmem:[%s135 + $0x48] sm:$0xff]
  %v146 = vld [vmem:[%s135 + $0x50] sm:$0xff]
  %v147 = vld [vmem:[%s135 + $0x58] sm:$0xff]
  %v148 = vld [vmem:[%s135 + $0x60] sm:$0xff]
  %v149 = vld [vmem:[%s135 + $0x68] sm:$0xff]
  %v150 = vld [vmem:[%s135 + $0x70] sm:$0xff]
  %v151 = vld [vmem:[%s135 + $0x78] sm:$0xff]
  %v152 = vld [vmem:[%s135 + $0x80] sm:$0xff]
  %v153 = vld [vmem:[%s135 + $0x88] sm:$0xff]
  %v154 = vld [vmem:[%s135 + $0x90] sm:$0xff]
  %v155 = vld [vmem:[%s135 + $0x98] sm:$0xff]
  %v156 = vld [vmem:[%s135 + $0xa0] sm:$0xff]
  %v157 = vld [vmem:[%s135 + $0xa8] sm:$0xff]
  %v158 = vld [vmem:[%s135 + $0xb0] sm:$0xff]
  %v159 = vld [vmem:[%s135 + $0xb8] sm:$0xff]
  %v160 = vld [vmem:[%s135 + $0xc0] sm:$0xff]
  %v161 = vld [vmem:[%s135 + $0xc8] sm:$0xff]
  %v162 = vld [vmem:[%s135 + $0xd0] sm:$0xff]
  %v163 = vld [vmem:[%s135 + $0xd8] sm:$0xff]
  %v164 = vld [vmem:[%s135 + $0xe0] sm:$0xff]
  %v165 = vld [vmem:[%s135 + $0xe8] sm:$0xff]
  %v166 = vld [vmem:[%s135 + $0xf0] sm:$0xff]
  %v167 = vld [vmem:[%s135 + $0xf8] sm:$0xff]
  %v168 = vld [vmem:[%s135 + $0x100] sm:$0xff]
  %v169 = vld [vmem:[%s135 + $0x108] sm:$0xff]
  %v170 = vld [vmem:[%s135 + $0x110] sm:$0xff]
  %v171 = vld [vmem:[%s135 + $0x118] sm:$0xff]
  %v172 = vld [vmem:[%s135 + $0x120] sm:$0xff]
  %v173 = vld [vmem:[%s135 + $0x128] sm:$0xff]
  %v174 = vld [vmem:[%s135 + $0x130] sm:$0xff]
  %v175 = vld [vmem:[%s135 + $0x138] sm:$0xff]
  %v176 = vadd.f32 %v95, %v136
  %v177 = vadd.f32 %v96, %v137
  %v178 = vadd.f32 %v97, %v138
  %v179 = vadd.f32 %v98, %v139
  %v180 = vadd.f32 %v99, %v140
  %v181 = vadd.f32 %v100, %v141
  %v182 = vadd.f32 %v101, %v142
  %v183 = vadd.f32 %v102, %v143
  %v184 = vadd.f32 %v103, %v144
  %v185 = vadd.f32 %v104, %v145
  %v186 = vadd.f32 %v105, %v146
  %v187 = vadd.f32 %v106, %v147
  %v188 = vadd.f32 %v107, %v148
  %v189 = vadd.f32 %v108, %v149
  %v190 = vadd.f32 %v109, %v150
  %v191 = vadd.f32 %v110, %v151
  %v192 = vadd.f32 %v111, %v152
  %v193 = vadd.f32 %v112, %v153
  %v194 = vadd.f32 %v113, %v154
  %v195 = vadd.f32 %v114, %v155
  %v196 = vadd.f32 %v115, %v156
  %v197 = vadd.f32 %v116, %v157
  %v198 = vadd.f32 %v117, %v158
  %v199 = vadd.f32 %v118, %v159
  %v200 = vadd.f32 %v119, %v160
  %v201 = vadd.f32 %v120, %v161
  %v202 = vadd.f32 %v121, %v162
  %v203 = vadd.f32 %v122, %v163
  %v204 = vadd.f32 %v123, %v164
  %v205 = vadd.f32 %v124, %v165
  %v206 = vadd.f32 %v125, %v166
  %v207 = vadd.f32 %v126, %v167
  %v208 = vadd.f32 %v127, %v168
  %v209 = vadd.f32 %v128, %v169
  %v210 = vadd.f32 %v129, %v170
  %v211 = vadd.f32 %v130, %v171
  %v212 = vadd.f32 %v131, %v172
  %v213 = vadd.f32 %v132, %v173
  %v214 = vadd.f32 %v133, %v174
  %v215 = vadd.f32 %v134, %v175
  %s216 = scalar_lea.vmem %s0, 960
  %v217 = vld [vmem:[%s216] sm:$0xff]
  %v218 = vld [vmem:[%s216 + $0x8] sm:$0xff]
  %v219 = vld [vmem:[%s216 + $0x10] sm:$0xff]
  %v220 = vld [vmem:[%s216 + $0x18] sm:$0xff]
  %v221 = vld [vmem:[%s216 + $0x20] sm:$0xff]
  %v222 = vld [vmem:[%s216 + $0x28] sm:$0xff]
  %v223 = vld [vmem:[%s216 + $0x30] sm:$0xff]
  %v224 = vld [vmem:[%s216 + $0x38] sm:$0xff]
  %v225 = vld [vmem:[%s216 + $0x40] sm:$0xff]
  %v226 = vld [vmem:[%s216 + $0x48] sm:$0xff]
  %v227 = vld [vmem:[%s216 + $0x50] sm:$0xff]
  %v228 = vld [vmem:[%s216 + $0x58] sm:$0xff]
  %v229 = vld [vmem:[%s216 + $0x60] sm:$0xff]
  %v230 = vld [vmem:[%s216 + $0x68] sm:$0xff]
  %v231 = vld [vmem:[%s216 + $0x70] sm:$0xff]
  %v232 = vld [vmem:[%s216 + $0x78] sm:$0xff]
  %v233 = vld [vmem:[%s216 + $0x80] sm:$0xff]
  %v234 = vld [vmem:[%s216 + $0x88] sm:$0xff]
  %v235 = vld [vmem:[%s216 + $0x90] sm:$0xff]
  %v236 = vld [vmem:[%s216 + $0x98] sm:$0xff]
  %v237 = vld [vmem:[%s216 + $0xa0] sm:$0xff]
  %v238 = vld [vmem:[%s216 + $0xa8] sm:$0xff]
  %v239 = vld [vmem:[%s216 + $0xb0] sm:$0xff]
  %v240 = vld [vmem:[%s216 + $0xb8] sm:$0xff]
  %v241 = vld [vmem:[%s216 + $0xc0] sm:$0xff]
  %v242 = vld [vmem:[%s216 + $0xc8] sm:$0xff]
  %v243 = vld [vmem:[%s216 + $0xd0] sm:$0xff]
  %v244 = vld [vmem:[%s216 + $0xd8] sm:$0xff]
  %v245 = vld [vmem:[%s216 + $0xe0] sm:$0xff]
  %v246 = vld [vmem:[%s216 + $0xe8] sm:$0xff]
  %v247 = vld [vmem:[%s216 + $0xf0] sm:$0xff]
  %v248 = vld [vmem:[%s216 + $0xf8] sm:$0xff]
  %v249 = vld [vmem:[%s216 + $0x100] sm:$0xff]
  %v250 = vld [vmem:[%s216 + $0x108] sm:$0xff]
  %v251 = vld [vmem:[%s216 + $0x110] sm:$0xff]
  %v252 = vld [vmem:[%s216 + $0x118] sm:$0xff]
  %v253 = vld [vmem:[%s216 + $0x120] sm:$0xff]
  %v254 = vld [vmem:[%s216 + $0x128] sm:$0xff]
  %v255 = vld [vmem:[%s216 + $0x130] sm:$0xff]
  %v256 = vld [vmem:[%s216 + $0x138] sm:$0xff]
  %v257 = vadd.f32 %v176, %v217
  %v258 = vadd.f32 %v177, %v218
  %v259 = vadd.f32 %v178, %v219
  %v260 = vadd.f32 %v179, %v220
  %v261 = vadd.f32 %v180, %v221
  %v262 = vadd.f32 %v181, %v222
  %v263 = vadd.f32 %v182, %v223
  %v264 = vadd.f32 %v183, %v224
  %v265 = vadd.f32 %v184, %v225
  %v266 = vadd.f32 %v185, %v226
  %v267 = vadd.f32 %v186, %v227
  %v268 = vadd.f32 %v187, %v228
  %v269 = vadd.f32 %v188, %v229
  %v270 = vadd.f32 %v189, %v230
  %v271 = vadd.f32 %v190, %v231
  %v272 = vadd.f32 %v191, %v232
  %v273 = vadd.f32 %v192, %v233
  %v274 = vadd.f32 %v193, %v234
  %v275 = vadd.f32 %v194, %v235
  %v276 = vadd.f32 %v195, %v236
  %v277 = vadd.f32 %v196, %v237
  %v278 = vadd.f32 %v197, %v238
  %v279 = vadd.f32 %v198, %v239
  %v280 = vadd.f32 %v199, %v240
  %v281 = vadd.f32 %v200, %v241
  %v282 = vadd.f32 %v201, %v242
  %v283 = vadd.f32 %v202, %v243
  %v284 = vadd.f32 %v203, %v244
  %v285 = vadd.f32 %v204, %v245
  %v286 = vadd.f32 %v205, %v246
  %v287 = vadd.f32 %v206, %v247
  %v288 = vadd.f32 %v207, %v248
  %v289 = vadd.f32 %v208, %v249
  %v290 = vadd.f32 %v209, %v250
  %v291 = vadd.f32 %v210, %v251
  %v292 = vadd.f32 %v211, %v252
  %v293 = vadd.f32 %v212, %v253
  %v294 = vadd.f32 %v213, %v254
  %v295 = vadd.f32 %v214, %v255
  %v296 = vadd.f32 %v215, %v256
  %v297 = vmul.f32 %v257, 0.25
  %v298 = vmul.f32 %v258, 0.25
  %v299 = vmul.f32 %v259, 0.25
  %v300 = vmul.f32 %v260, 0.25
  %v301 = vmul.f32 %v261, 0.25
  %v302 = vmul.f32 %v262, 0.25
  %v303 = vmul.f32 %v263, 0.25
  %v304 = vmul.f32 %v264, 0.25
  %v305 = vmul.f32 %v265, 0.25
  %v306 = vmul.f32 %v266, 0.25
  %v307 = vmul.f32 %v267, 0.25
  %v308 = vmul.f32 %v268, 0.25
  %v309 = vmul.f32 %v269, 0.25
  %v310 = vmul.f32 %v270, 0.25
  %v311 = vmul.f32 %v271, 0.25
  %v312 = vmul.f32 %v272, 0.25
  %v313 = vmul.f32 %v273, 0.25
  %v314 = vmul.f32 %v274, 0.25
  %v315 = vmul.f32 %v275, 0.25
  %v316 = vmul.f32 %v276, 0.25
  %v317 = vmul.f32 %v277, 0.25
  %v318 = vmul.f32 %v278, 0.25
  %v319 = vmul.f32 %v279, 0.25
  %v320 = vmul.f32 %v280, 0.25
  %v321 = vmul.f32 %v281, 0.25
  %v322 = vmul.f32 %v282, 0.25
  %v323 = vmul.f32 %v283, 0.25
  %v324 = vmul.f32 %v284, 0.25
  %v325 = vmul.f32 %v285, 0.25
  %v326 = vmul.f32 %v286, 0.25
  %v327 = vmul.f32 %v287, 0.25
  %v328 = vmul.f32 %v288, 0.25
  %v329 = vmul.f32 %v289, 0.25
  %v330 = vmul.f32 %v290, 0.25
  %v331 = vmul.f32 %v291, 0.25
  %v332 = vmul.f32 %v292, 0.25
  %v333 = vmul.f32 %v293, 0.25
  %v334 = vmul.f32 %v294, 0.25
  %v335 = vmul.f32 %v295, 0.25
  %v336 = vmul.f32 %v296, 0.25
  %v337 = vld [vmem:[%s1] sm:$0x3f]
  %v338 = vld [vmem:[%s2] sm:$0x3f]
  %340 = vset.pattern.permute.xlu0 0
  %341 = vperm.xlu0 %340, %v338
  %v342 = vpop.permute.xlu0 %341
  %vm344 = vcmask 654336
  %v346 = vsel %vm344, %v337, 0
  %348 = vmatpush.msra.mxu0 0.0
  %349 = vmatpush.msra.mxu0 0.0
  %350 = vmatpush.msra.mxu0 0.0
  %351 = vmatpush.msra.mxu0 0.0
  %352 = vmatpush.msra.mxu0 0.0
  %353 = vmatpush.msra.mxu0 0.0
  %354 = vmatpush.msra.mxu0 %v333
  %355 = vmatpush.msra.mxu0 %v329
  %356 = vmatpush.msra.mxu0 %v325
  %357 = vmatpush.msra.mxu0 %v321
  %358 = vmatpush.msra.mxu0 %v317
  %359 = vmatpush.msra.mxu0 %v313
  %360 = vmatpush.msra.mxu0 %v309
  %361 = vmatpush.msra.mxu0 %v305
  %362 = vmatpush.msra.mxu0 %v301
  %363 = vmatpush.msra.mxu0 %v297
  %364 = vmatmul.f32.gmra.mxu0 %v346
  %v365 = vpop.f32.mrf.mxu0
  %v366 = vadd.f32 %v342, %v365
  %367 = vdwg.mxu0
  %368 = vmatpush.msra.mxu0 0.0
  %369 = vmatpush.msra.mxu0 0.0
  %370 = vmatpush.msra.mxu0 0.0
  %371 = vmatpush.msra.mxu0 0.0
  %372 = vmatpush.msra.mxu0 0.0
  %373 = vmatpush.msra.mxu0 0.0
  %374 = vmatpush.msra.mxu0 %v334
  %375 = vmatpush.msra.mxu0 %v330
  %376 = vmatpush.msra.mxu0 %v326
  %377 = vmatpush.msra.mxu0 %v322
  %378 = vmatpush.msra.mxu0 %v318
  %379 = vmatpush.msra.mxu0 %v314
  %380 = vmatpush.msra.mxu0 %v310
  %381 = vmatpush.msra.mxu0 %v306
  %382 = vmatpush.msra.mxu0 %v302
  %383 = vmatpush.msra.mxu0 %v298
  %384 = vmatmul.f32.gmra.mxu0 %v346
  %v385 = vpop.f32.mrf.mxu0
  %v386 = vadd.f32 %v342, %v385
  %387 = vdwg.mxu0
  %388 = vmatpush.msra.mxu0 0.0
  %389 = vmatpush.msra.mxu0 0.0
  %390 = vmatpush.msra.mxu0 0.0
  %391 = vmatpush.msra.mxu0 0.0
  %392 = vmatpush.msra.mxu0 0.0
  %393 = vmatpush.msra.mxu0 0.0
  %394 = vmatpush.msra.mxu0 %v335
  %395 = vmatpush.msra.mxu0 %v331
  %396 = vmatpush.msra.mxu0 %v327
  %397 = vmatpush.msra.mxu0 %v323
  %398 = vmatpush.msra.mxu0 %v319
  %399 = vmatpush.msra.mxu0 %v315
  %400 = vmatpush.msra.mxu0 %v311
  %401 = vmatpush.msra.mxu0 %v307
  %402 = vmatpush.msra.mxu0 %v303
  %403 = vmatpush.msra.mxu0 %v299
  %404 = vmatmul.f32.gmra.mxu0 %v346
  %v405 = vpop.f32.mrf.mxu0
  %v406 = vadd.f32 %v342, %v405
  %407 = vdwg.mxu0
  %408 = vmatpush.msra.mxu0 0.0
  %409 = vmatpush.msra.mxu0 0.0
  %410 = vmatpush.msra.mxu0 0.0
  %411 = vmatpush.msra.mxu0 0.0
  %412 = vmatpush.msra.mxu0 0.0
  %413 = vmatpush.msra.mxu0 0.0
  %414 = vmatpush.msra.mxu0 %v336
  %415 = vmatpush.msra.mxu0 %v332
  %416 = vmatpush.msra.mxu0 %v328
  %417 = vmatpush.msra.mxu0 %v324
  %418 = vmatpush.msra.mxu0 %v320
  %419 = vmatpush.msra.mxu0 %v316
  %420 = vmatpush.msra.mxu0 %v312
  %421 = vmatpush.msra.mxu0 %v308
  %422 = vmatpush.msra.mxu0 %v304
  %423 = vmatpush.msra.mxu0 %v300
  %424 = vmatmul.f32.gmra.mxu0 %v346
  %v425 = vpop.f32.mrf.mxu0
  %v426 = vadd.f32 %v342, %v425
  %427 = vdwg.mxu0
  %428 = vst [vmem:[%s3] sm:$0x3f] %v366
  %429 = vst [vmem:[%s3 + $0x8] sm:$0x3f] %v386
  %430 = vst [vmem:[%s3 + $0x10] sm:$0x3f] %v406
  %vm431 = vcmask 62464
  %432 = vst.msk [vmem:[%s3 + $0x18] sm:$0x3f] %vm431, %v426
  // Predicated region
  $region14: #{lenet_forward.3} parent=0 // pred_check
    _
  $region15: #{lenet_forward.3} parent=0 // pred_check_branch
    %434 = sbr.rel (0) target = $region17
  $region16: #{lenet_forward.3} parent=0 // pred_region
    _
  $region17: #{lenet_forward.3} parent=0 // pred_fallthru
    _
  // Predicated region
  $region18: #{lenet_forward.3} parent=0 // pred_check
    _
  $region19: #{lenet_forward.3} parent=0 // pred_check_branch
    %436 = sbr.rel (0) target = $region21
  $region20: #{lenet_forward.3} parent=0 // pred_region
    _
  $region21: #{lenet_forward.3} parent=0 // pred_fallthru
    _

// kernel: lenet_forward.4
$region0: #{lenet_forward.4}
  #allocation0 [shape = 'u32[]', space=smem, size = 0x4, offset = 0x4, fixed_abs, tag = 'smem constant byte address 0x4 - core index']
  #allocation1 [shape = 'u32[72,128]{1,0:T(1,128)}', space=vmem, size = 0x9000, scoped, tag = 'internal scratch']
  %s0 = inlined_call_operand.vmem [shape: f32[4,152,50], index: 0, kind: input, shape index: {}]
  %s1 = inlined_call_operand.vmem [shape: f32[16,152], index: 1, kind: input, shape index: {}]
  %s2 = inlined_call_operand.vmem [shape: f32[16,1], index: 2, kind: input, shape index: {}]
  %s3 = inlined_call_operand.vmem [shape: f32[16,50], index: 3, kind: output, shape index: {}]
  %s4 = sld [smem:[#allocation0]]
  $region22: #{lenet_forward.4} parent=0
    _
  %s6 = ssub.s32 1, %s4
  %s7 = scalar_select 0, %s6, %s4
  // Predicated region
  $region2: #{lenet_forward.4} parent=0 // pred_check
    _
  $region3: #{lenet_forward.4} parent=0 // pred_check_branch
    %9 = sbr.rel (0) target = $region5
  $region4: #{lenet_forward.4} parent=0 // pred_region
    _
  $region5: #{lenet_forward.4} parent=0 // pred_fallthru
    _
  // Predicated region
  $region6: #{lenet_forward.4} parent=0 // pred_check
    _
  $region7: #{lenet_forward.4} parent=0 // pred_check_branch
    %11 = sbr.rel (0) target = $region9
  $region8: #{lenet_forward.4} parent=0 // pred_region
    _
  $region9: #{lenet_forward.4} parent=0 // pred_fallthru
    _
  // Predicated region
  $region10: #{lenet_forward.4} parent=0 // pred_check
    _
  $region11: #{lenet_forward.4} parent=0 // pred_check_branch
    %13 = sbr.rel (0) target = $region13
  $region12: #{lenet_forward.4} parent=0 // pred_region
    _
  $region13: #{lenet_forward.4} parent=0 // pred_fallthru
    _
  %v14 = vld [vmem:[%s0] sm:$0xff]
  %v15 = vld [vmem:[%s0 + $0x8] sm:$0xff]
  %v16 = vld [vmem:[%s0 + $0x10] sm:$0xff]
  %v17 = vld [vmem:[%s0 + $0x18] sm:$0xff]
  %v18 = vld [vmem:[%s0 + $0x20] sm:$0xff]
  %v19 = vld [vmem:[%s0 + $0x28] sm:$0xff]
  %v20 = vld [vmem:[%s0 + $0x30] sm:$0xff]
  %v21 = vld [vmem:[%s0 + $0x38] sm:$0xff]
  %v22 = vld [vmem:[%s0 + $0x40] sm:$0xff]
  %v23 = vld [vmem:[%s0 + $0x48] sm:$0xff]
  %v24 = vld [vmem:[%s0 + $0x50] sm:$0xff]
  %v25 = vld [vmem:[%s0 + $0x58] sm:$0xff]
  %v26 = vld [vmem:[%s0 + $0x60] sm:$0xff]
  %v27 = vld [vmem:[%s0 + $0x68] sm:$0xff]
  %v28 = vld [vmem:[%s0 + $0x70] sm:$0xff]
  %v29 = vld [vmem:[%s0 + $0x78] sm:$0xff]
  %v30 = vld [vmem:[%s0 + $0x80] sm:$0xff]
  %v31 = vld [vmem:[%s0 + $0x88] sm:$0xff]
  %v32 = vld [vmem:[%s0 + $0x90] sm:$0xff]
  %s33 = scalar_lea.vmem %s0, 152
  %v34 = vld [vmem:[%s33] sm:$0xff]
  %v35 = vld [vmem:[%s33 + $0x8] sm:$0xff]
  %v36 = vld [vmem:[%s33 + $0x10] sm:$0xff]
  %v37 = vld [vmem:[%s33 + $0x18] sm:$0xff]
  %v38 = vld [vmem:[%s33 + $0x20] sm:$0xff]
  %v39 = vld [vmem:[%s33 + $0x28] sm:$0xff]
  %v40 = vld [vmem:[%s33 + $0x30] sm:$0xff]
  %v41 = vld [vmem:[%s33 + $0x38] sm:$0xff]
  %v42 = vld [vmem:[%s33 + $0x40] sm:$0xff]
  %v43 = vld [vmem:[%s33 + $0x48] sm:$0xff]
  %v44 = vld [vmem:[%s33 + $0x50] sm:$0xff]
  %v45 = vld [vmem:[%s33 + $0x58] sm:$0xff]
  %v46 = vld [vmem:[%s33 + $0x60] sm:$0xff]
  %v47 = vld [vmem:[%s33 + $0x68] sm:$0xff]
  %v48 = vld [vmem:[%s33 + $0x70] sm:$0xff]
  %v49 = vld [vmem:[%s33 + $0x78] sm:$0xff]
  %v50 = vld [vmem:[%s33 + $0x80] sm:$0xff]
  %v51 = vld [vmem:[%s33 + $0x88] sm:$0xff]
  %v52 = vld [vmem:[%s33 + $0x90] sm:$0xff]
  %v53 = vadd.f32 %v14, %v34
  %v54 = vadd.f32 %v15, %v35
  %v55 = vadd.f32 %v16, %v36
  %v56 = vadd.f32 %v17, %v37
  %v57 = vadd.f32 %v18, %v38
  %v58 = vadd.f32 %v19, %v39
  %v59 = vadd.f32 %v20, %v40
  %v60 = vadd.f32 %v21, %v41
  %v61 = vadd.f32 %v22, %v42
  %v62 = vadd.f32 %v23, %v43
  %v63 = vadd.f32 %v24, %v44
  %v64 = vadd.f32 %v25, %v45
  %v65 = vadd.f32 %v26, %v46
  %v66 = vadd.f32 %v27, %v47
  %v67 = vadd.f32 %v28, %v48
  %v68 = vadd.f32 %v29, %v49
  %v69 = vadd.f32 %v30, %v50
  %v70 = vadd.f32 %v31, %v51
  %v71 = vadd.f32 %v32, %v52
  %s72 = scalar_lea.vmem %s0, 304
  %v73 = vld [vmem:[%s72] sm:$0xff]
  %v74 = vld [vmem:[%s72 + $0x8] sm:$0xff]
  %v75 = vld [vmem:[%s72 + $0x10] sm:$0xff]
  %v76 = vld [vmem:[%s72 + $0x18] sm:$0xff]
  %v77 = vld [vmem:[%s72 + $0x20] sm:$0xff]
  %v78 = vld [vmem:[%s72 + $0x28] sm:$0xff]
  %v79 = vld [vmem:[%s72 + $0x30] sm:$0xff]
  %v80 = vld [vmem:[%s72 + $0x38] sm:$0xff]
  %v81 = vld [vmem:[%s72 + $0x40] sm:$0xff]
  %v82 = vld [vmem:[%s72 + $0x48] sm:$0xff]
  %v83 = vld [vmem:[%s72 + $0x50] sm:$0xff]
  %v84 = vld [vmem:[%s72 + $0x58] sm:$0xff]
  %v85 = vld [vmem:[%s72 + $0x60] sm:$0xff]
  %v86 = vld [vmem:[%s72 + $0x68] sm:$0xff]
  %v87 = vld [vmem:[%s72 + $0x70] sm:$0xff]
  %v88 = vld [vmem:[%s72 + $0x78] sm:$0xff]
  %v89 = vld [vmem:[%s72 + $0x80] sm:$0xff]
  %v90 = vld [vmem:[%s72 + $0x88] sm:$0xff]
  %v91 = vld [vmem:[%s72 + $0x90] sm:$0xff]
  %v92 = vadd.f32 %v53, %v73
  %v93 = vadd.f32 %v54, %v74
  %v94 = vadd.f32 %v55, %v75
  %v95 = vadd.f32 %v56, %v76
  %v96 = vadd.f32 %v57, %v77
  %v97 = vadd.f32 %v58, %v78
  %v98 = vadd.f32 %v59, %v79
  %v99 = vadd.f32 %v60, %v80
  %v100 = vadd.f32 %v61, %v81
  %v101 = vadd.f32 %v62, %v82
  %v102 = vadd.f32 %v63, %v83
  %v103 = vadd.f32 %v64, %v84
  %v104 = vadd.f32 %v65, %v85
  %v105 = vadd.f32 %v66, %v86
  %v106 = vadd.f32 %v67, %v87
  %v107 = vadd.f32 %v68, %v88
  %v108 = vadd.f32 %v69, %v89
  %v109 = vadd.f32 %v70, %v90
  %v110 = vadd.f32 %v71, %v91
  %s111 = scalar_lea.vmem %s0, 456
  %v112 = vld [vmem:[%s111] sm:$0xff]
  %v113 = vld [vmem:[%s111 + $0x8] sm:$0xff]
  %v114 = vld [vmem:[%s111 + $0x10] sm:$0xff]
  %v115 = vld [vmem:[%s111 + $0x18] sm:$0xff]
  %v116 = vld [vmem:[%s111 + $0x20] sm:$0xff]
  %v117 = vld [vmem:[%s111 + $0x28] sm:$0xff]
  %v118 = vld [vmem:[%s111 + $0x30] sm:$0xff]
  %v119 = vld [vmem:[%s111 + $0x38] sm:$0xff]
  %v120 = vld [vmem:[%s111 + $0x40] sm:$0xff]
  %v121 = vld [vmem:[%s111 + $0x48] sm:$0xff]
  %v122 = vld [vmem:[%s111 + $0x50] sm:$0xff]
  %v123 = vld [vmem:[%s111 + $0x58] sm:$0xff]
  %v124 = vld [vmem:[%s111 + $0x60] sm:$0xff]
  %v125 = vld [vmem:[%s111 + $0x68] sm:$0xff]
  %v126 = vld [vmem:[%s111 + $0x70] sm:$0xff]
  %v127 = vld [vmem:[%s111 + $0x78] sm:$0xff]
  %v128 = vld [vmem:[%s111 + $0x80] sm:$0xff]
  %v129 = vld [vmem:[%s111 + $0x88] sm:$0xff]
  %v130 = vld [vmem:[%s111 + $0x90] sm:$0xff]
  %v131 = vadd.f32 %v92, %v112
  %v132 = vadd.f32 %v93, %v113
  %v133 = vadd.f32 %v94, %v114
  %v134 = vadd.f32 %v95, %v115
  %v135 = vadd.f32 %v96, %v116
  %v136 = vadd.f32 %v97, %v117
  %v137 = vadd.f32 %v98, %v118
  %v138 = vadd.f32 %v99, %v119
  %v139 = vadd.f32 %v100, %v120
  %v140 = vadd.f32 %v101, %v121
  %v141 = vadd.f32 %v102, %v122
  %v142 = vadd.f32 %v103, %v123
  %v143 = vadd.f32 %v104, %v124
  %v144 = vadd.f32 %v105, %v125
  %v145 = vadd.f32 %v106, %v126
  %v146 = vadd.f32 %v107, %v127
  %v147 = vadd.f32 %v108, %v128
  %v148 = vadd.f32 %v109, %v129
  %v149 = vadd.f32 %v110, %v130
  %v150 = vmul.f32 %v131, 0.25
  %v151 = vmul.f32 %v132, 0.25
  %v152 = vmul.f32 %v133, 0.25
  %v153 = vmul.f32 %v134, 0.25
  %v154 = vmul.f32 %v135, 0.25
  %v155 = vmul.f32 %v136, 0.25
  %v156 = vmul.f32 %v137, 0.25
  %v157 = vmul.f32 %v138, 0.25
  %v158 = vmul.f32 %v139, 0.25
  %v159 = vmul.f32 %v140, 0.25
  %v160 = vmul.f32 %v141, 0.25
  %v161 = vmul.f32 %v142, 0.25
  %v162 = vmul.f32 %v143, 0.25
  %v163 = vmul.f32 %v144, 0.25
  %v164 = vmul.f32 %v145, 0.25
  %v165 = vmul.f32 %v146, 0.25
  %v166 = vmul.f32 %v147, 0.25
  %v167 = vmul.f32 %v148, 0.25
  %v168 = vmul.f32 %v149, 0.25
  %v169 = vld [vmem:[%s1] sm:$0xff]
  %v170 = vld [vmem:[%s1 + $0x8] sm:$0xff]
  %v171 = vld [vmem:[%s1 + $0x10] sm:$0xff]
  %v172 = vld [vmem:[%s1 + $0x18] sm:$0xff]
  %v173 = vld [vmem:[%s2] sm:$0xff]
  %v174 = vld [vmem:[%s2 + $0x8] sm:$0xff]
  %176 = vset.pattern.permute.xlu0 0
  %177 = vperm.xlu0 %176, %v173
  %v178 = vpop.permute.xlu0 %177
  %181 = vset.pattern.permute.xlu0 0
  %182 = vperm.xlu0 %181, %v174
  %v183 = vpop.permute.xlu0 %182
  %vm185 = vcmask 195584
  %v187 = vsel %vm185, %v170, 0
  %v190 = vsel %vm185, %v172, 0
  %192 = vmatpush.msra.mxu0 %v165
  %193 = vmatpush.msra.mxu0 %v164
  %194 = vmatpush.msra.mxu0 %v163
  %195 = vmatpush.msra.mxu0 %v162
  %196 = vmatpush.msra.mxu0 %v161
  %197 = vmatpush.msra.mxu0 %v160
  %198 = vmatpush.msra.mxu0 %v159
  %199 = vmatpush.msra.mxu0 %v158
  %200 = vmatpush.msra.mxu0 %v157
  %201 = vmatpush.msra.mxu0 %v156
  %202 = vmatpush.msra.mxu0 %v155
  %203 = vmatpush.msra.mxu0 %v154
  %204 = vmatpush.msra.mxu0 %v153
  %205 = vmatpush.msra.mxu0 %v152
  %206 = vmatpush.msra.mxu0 %v151
  %207 = vmatpush.msra.mxu0 %v150
  %208 = vmatmul.f32.gmra.mxu0 %v169
  %v209 = vpop.f32.mrf.mxu0
  %v210 = vadd.f32 %v178, %v209
  %211 = vmatmul.f32.gmra.mxu0 %v171
  %v212 = vpop.f32.mrf.mxu0
  %v213 = vadd.f32 %v183, %v212
  %214 = vdwg.mxu0
  %215 = vmatpush.msra.mxu0 0.0
  %216 = vmatpush.msra.mxu0 0.0
  %217 = vmatpush.msra.mxu0 0.0
  %218 = vmatpush.msra.mxu0 0.0
  %219 = vmatpush.msra.mxu0 0.0
  %220 = vmatpush.msra.mxu0 0.0
  %221 = vmatpush.msra.mxu0 0.0
  %222 = vmatpush.msra.mxu0 0.0
  %223 = vmatpush.msra.mxu0 0.0
  %224 = vmatpush.msra.mxu0 0.0
  %225 = vmatpush.msra.mxu0 0.0
  %226 = vmatpush.msra.mxu0 0.0
  %227 = vmatpush.msra.mxu0 0.0
  %228 = vmatpush.msra.mxu0 %v168
  %229 = vmatpush.msra.mxu0 %v167
  %230 = vmatpush.msra.mxu0 %v166
  %231 = vmatmul.f32.gmra.mxu0 %v187
  %v232 = vpop.f32.mrf.mxu0
  %v233 = vadd.f32 %v210, %v232
  %234 = vmatmul.f32.gmra.mxu0 %v190
  %v235 = vpop.f32.mrf.mxu0
  %v236 = vadd.f32 %v213, %v235
  %237 = vdwg.mxu0
  %vm238 = vcmask 408576
  %239 = vst.msk [vmem:[%s3] sm:$0xff] %vm238, %v233
  %240 = vst.msk [vmem:[%s3 + $0x8] sm:$0xff] %vm238, %v236
  // Predicated region
  $region14: #{lenet_forward.4} parent=0 // pred_check
    _
  $region15: #{lenet_forward.4} parent=0 // pred_check_branch
    %242 = sbr.rel (0) target = $region17
  $region16: #{lenet_forward.4} parent=0 // pred_region
    _
  $region17: #{lenet_forward.4} parent=0 // pred_fallthru
    _
  // Predicated region
  $region18: #{lenet_forward.4} parent=0 // pred_check
    _
  $region19: #{lenet_forward.4} parent=0 // pred_check_branch
    %244 = sbr.rel (0) target = $region21
  $region20: #{lenet_forward.4} parent=0 // pred_region
    _
  $region21: #{lenet_forward.4} parent=0 // pred_fallthru
    _

// kernel: lenet_forward.5
$region0: #{lenet_forward.5}
  #allocation0 [shape = 'u32[]', space=smem, size = 0x4, offset = 0x4, fixed_abs, tag = 'smem constant byte address 0x4 - core index']
  #allocation1 [shape = 'u32[72,128]{1,0:T(1,128)}', space=vmem, size = 0x9000, scoped, tag = 'internal scratch']
  %s0 = inlined_call_operand.vmem [shape: f32[2,400], index: 0, kind: input, shape index: {}]
  %s1 = inlined_call_operand.vmem [shape: f32[400,120], index: 1, kind: input, shape index: {}]
  %s2 = inlined_call_operand.vmem [shape: f32[1,120], index: 2, kind: input, shape index: {}]
  %s3 = inlined_call_operand.vmem [shape: f32[120,84], index: 3, kind: input, shape index: {}]
  %s4 = inlined_call_operand.vmem [shape: f32[1,84], index: 4, kind: input, shape index: {}]
  %s5 = inlined_call_operand.vmem [shape: f32[84,10], index: 5, kind: input, shape index: {}]
  %s6 = inlined_call_operand.vmem [shape: f32[1,10], index: 6, kind: input, shape index: {}]
  %s7 = inlined_call_operand.hbm [shape: f32[2,10], index: 7, kind: output, shape index: {}]
  %s8 = sld [smem:[#allocation0]]
  $region38: #{lenet_forward.5} parent=0
    _
  %s10 = ssub.s32 1, %s8
  %s11 = scalar_select 0, %s10, %s8
  $region1: #{lenet_forward.5} parent=0
    #allocation2 [shape = 'u8[1024]{0}', space=vmem, size = 0x400, scoped, tag = 'output window, operand 0, single buffered']
    #allocation3 [shape = 's32[1]{0}', space=sflag, size = 0x4, scoped, tag = 'scoped memory for lenet_forward.5']
    %12 = vsyncpa [#allocation3], 0
    // Predicated region
    $region2: #{lenet_forward.5} parent=1 // pred_check
      _
    $region3: #{lenet_forward.5} parent=1 // pred_check_branch
      %14 = sbr.rel (0) target = $region5
    $region4: #{lenet_forward.5} parent=1 // pred_region
      _
    $region5: #{lenet_forward.5} parent=1 // pred_fallthru
      _
    // Predicated region
    $region6: #{lenet_forward.5} parent=1 // pred_check
      _
    $region7: #{lenet_forward.5} parent=1 // pred_check_branch
      %16 = sbr.rel (0) target = $region9
    $region8: #{lenet_forward.5} parent=1 // pred_region
      _
    $region9: #{lenet_forward.5} parent=1 // pred_fallthru
      _
    // Predicated region
    $region10: #{lenet_forward.5} parent=1 // pred_check
      _
    $region11: #{lenet_forward.5} parent=1 // pred_check_branch
      %18 = sbr.rel (0) target = $region13
    $region12: #{lenet_forward.5} parent=1 // pred_region
      _
    $region13: #{lenet_forward.5} parent=1 // pred_fallthru
      _
    // Predicated region
    $region14: #{lenet_forward.5} parent=1 // pred_check
      _
    $region15: #{lenet_forward.5} parent=1 // pred_check_branch
      %20 = sbr.rel (0) target = $region17
    $region16: #{lenet_forward.5} parent=1 // pred_region
      _
    $region17: #{lenet_forward.5} parent=1 // pred_fallthru
      _
    // Predicated region
    $region18: #{lenet_forward.5} parent=1 // pred_check
      _
    $region19: #{lenet_forward.5} parent=1 // pred_check_branch
      %22 = sbr.rel (0) target = $region21
    $region20: #{lenet_forward.5} parent=1 // pred_region
      _
    $region21: #{lenet_forward.5} parent=1 // pred_fallthru
      _
    // Predicated region
    $region22: #{lenet_forward.5} parent=1 // pred_check
      _
    $region23: #{lenet_forward.5} parent=1 // pred_check_branch
      %24 = sbr.rel (0) target = $region25
    $region24: #{lenet_forward.5} parent=1 // pred_region
      _
    $region25: #{lenet_forward.5} parent=1 // pred_fallthru
      _
    // Predicated region
    $region26: #{lenet_forward.5} parent=1 // pred_check
      _
    $region27: #{lenet_forward.5} parent=1 // pred_check_branch
      %26 = sbr.rel (0) target = $region29
    $region28: #{lenet_forward.5} parent=1 // pred_region
      _
    $region29: #{lenet_forward.5} parent=1 // pred_fallthru
      _
    %v27 = vld [vmem:[%s0] sm:$0xff]
    %v28 = vld [vmem:[%s1] sm:$0xff]
    %v29 = vld [vmem:[%s1 + $0x8] sm:$0xff]
    %v30 = vld [vmem:[%s1 + $0x10] sm:$0xff]
    %v31 = vld [vmem:[%s1 + $0x18] sm:$0xff]
    %v32 = vld [vmem:[%s1 + $0x20] sm:$0xff]
    %v33 = vld [vmem:[%s1 + $0x28] sm:$0xff]
    %v34 = vld [vmem:[%s1 + $0x30] sm:$0xff]
    %v35 = vld [vmem:[%s1 + $0x38] sm:$0xff]
    %v36 = vld [vmem:[%s1 + $0x40] sm:$0xff]
    %v37 = vld [vmem:[%s1 + $0x48] sm:$0xff]
    %v38 = vld [vmem:[%s1 + $0x50] sm:$0xff]
    %v39 = vld [vmem:[%s1 + $0x58] sm:$0xff]
    %v40 = vld [vmem:[%s1 + $0x60] sm:$0xff]
    %v41 = vld [vmem:[%s1 + $0x68] sm:$0xff]
    %v42 = vld [vmem:[%s1 + $0x70] sm:$0xff]
    %v43 = vld [vmem:[%s1 + $0x78] sm:$0xff]
    %v44 = vld [vmem:[%s1 + $0x80] sm:$0xff]
    %v45 = vld [vmem:[%s1 + $0x88] sm:$0xff]
    %v46 = vld [vmem:[%s1 + $0x90] sm:$0xff]
    %v47 = vld [vmem:[%s1 + $0x98] sm:$0xff]
    %v48 = vld [vmem:[%s1 + $0xa0] sm:$0xff]
    %v49 = vld [vmem:[%s1 + $0xa8] sm:$0xff]
    %v50 = vld [vmem:[%s1 + $0xb0] sm:$0xff]
    %v51 = vld [vmem:[%s1 + $0xb8] sm:$0xff]
    %v52 = vld [vmem:[%s1 + $0xc0] sm:$0xff]
    %v53 = vld [vmem:[%s1 + $0xc8] sm:$0xff]
    %v54 = vld [vmem:[%s1 + $0xd0] sm:$0xff]
    %v55 = vld [vmem:[%s1 + $0xd8] sm:$0xff]
    %v56 = vld [vmem:[%s1 + $0xe0] sm:$0xff]
    %v57 = vld [vmem:[%s1 + $0xe8] sm:$0xff]
    %v58 = vld [vmem:[%s1 + $0xf0] sm:$0xff]
    %v59 = vld [vmem:[%s1 + $0xf8] sm:$0xff]
    %v60 = vld [vmem:[%s1 + $0x100] sm:$0xff]
    %v61 = vld [vmem:[%s1 + $0x108] sm:$0xff]
    %v62 = vld [vmem:[%s1 + $0x110] sm:$0xff]
    %v63 = vld [vmem:[%s1 + $0x118] sm:$0xff]
    %v64 = vld [vmem:[%s1 + $0x120] sm:$0xff]
    %v65 = vld [vmem:[%s1 + $0x128] sm:$0xff]
    %v66 = vld [vmem:[%s1 + $0x130] sm:$0xff]
    %v67 = vld [vmem:[%s1 + $0x138] sm:$0xff]
    %v68 = vld [vmem:[%s1 + $0x140] sm:$0xff]
    %v69 = vld [vmem:[%s1 + $0x148] sm:$0xff]
    %v70 = vld [vmem:[%s1 + $0x150] sm:$0xff]
    %v71 = vld [vmem:[%s1 + $0x158] sm:$0xff]
    %v72 = vld [vmem:[%s1 + $0x160] sm:$0xff]
    %v73 = vld [vmem:[%s1 + $0x168] sm:$0xff]
    %v74 = vld [vmem:[%s1 + $0x170] sm:$0xff]
    %v75 = vld [vmem:[%s1 + $0x178] sm:$0xff]
    %v76 = vld [vmem:[%s1 + $0x180] sm:$0xff]
    %v77 = vld [vmem:[%s1 + $0x188] sm:$0xff]
    %v78 = vld [vmem:[%s2] sm:$0x1]
    %v80 = vperm.slane %v78, 0
    %83 = vst [vmem:[#allocation1] ss:$4 sm:$0xff] %v27
    %v84 = vld.sshfl [vmem:[#allocation1] sm:$0xff pattern:$0x73625140]
    %v85 = vld.sshfl [vmem:[#allocation1 + $0x8] sm:$0xff pattern:$0x73625140]
    %v86 = vld.sshfl [vmem:[#allocation1 + $0x10] sm:$0xff pattern:$0x73625140]
    %v87 = vld.sshfl [vmem:[#allocation1 + $0x18] sm:$0xff pattern:$0x73625140]
    %vm91 = vcmask 130048
    %v92 = vsel %vm91, %v87, 0
    %94 = vmatpush.msra.mxu0 %v43
    %95 = vmatpush.msra.mxu0 %v42
    %96 = vmatpush.msra.mxu0 %v41
    %97 = vmatpush.msra.mxu0 %v40
    %98 = vmatpush.msra.mxu0 %v39
    %99 = vmatpush.msra.mxu0 %v38
    %100 = vmatpush.msra.mxu0 %v37
    %101 = vmatpush.msra.mxu0 %v36
    %102 = vmatpush.msra.mxu0 %v35
    %103 = vmatpush.msra.mxu0 %v34
    %104 = vmatpush.msra.mxu0 %v33
    %105 = vmatpush.msra.mxu0 %v32
    %106 = vmatpush.msra.mxu0 %v31
    %107 = vmatpush.msra.mxu0 %v30
    %108 = vmatpush.msra.mxu0 %v29
    %109 = vmatpush.msra.mxu0 %v28
    %110 = vmatmul.f32.gmra.mxu0 %v84
    %v111 = vpop.f32.mrf.mxu0
    %v112 = vadd.f32 %v80, %v111
    %113 = vdwg.mxu0
    %114 = vmatpush.msra.mxu0 %v59
    %115 = vmatpush.msra.mxu0 %v58
    %116 = vmatpush.msra.mxu0 %v57
    %117 = vmatpush.msra.mxu0 %v56
    %118 = vmatpush.msra.mxu0 %v55
    %119 = vmatpush.msra.mxu0 %v54
    %120 = vmatpush.msra.mxu0 %v53
    %121 = vmatpush.msra.mxu0 %v52
    %122 = vmatpush.msra.mxu0 %v51
    %123 = vmatpush.msra.mxu0 %v50
    %124 = vmatpush.msra.mxu0 %v49
    %125 = vmatpush.msra.mxu0 %v48
    %126 = vmatpush.msra.mxu0 %v47
    %127 = vmatpush.msra.mxu0 %v46
    %128 = vmatpush.msra.mxu0 %v45
    %129 = vmatpush.msra.mxu0 %v44
    %130 = vmatmul.f32.gmra.mxu0 %v85
    %v131 = vpop.f32.mrf.mxu0
    %v132 = vadd.f32 %v112, %v131
    %133 = vdwg.mxu0
    %134 = vmatpush.msra.mxu0 %v75
    %135 = vmatpush.msra.mxu0 %v74
    %136 = vmatpush.msra.mxu0 %v73
    %137 = vmatpush.msra.mxu0 %v72
    %138 = vmatpush.msra.mxu0 %v71
    %139 = vmatpush.msra.mxu0 %v70
    %140 = vmatpush.msra.mxu0 %v69
    %141 = vmatpush.msra.mxu0 %v68
    %142 = vmatpush.msra.mxu0 %v67
    %143 = vmatpush.msra.mxu0 %v66
    %144 = vmatpush.msra.mxu0 %v65
    %145 = vmatpush.msra.mxu0 %v64
    %146 = vmatpush.msra.mxu0 %v63
    %147 = vmatpush.msra.mxu0 %v62
    %148 = vmatpush.msra.mxu0 %v61
    %149 = vmatpush.msra.mxu0 %v60
    %150 = vmatmul.f32.gmra.mxu0 %v86
    %v151 = vpop.f32.mrf.mxu0
    %v152 = vadd.f32 %v132, %v151
    %153 = vdwg.mxu0
    %154 = vmatpush.msra.mxu0 0.0
    %155 = vmatpush.msra.mxu0 0.0
    %156 = vmatpush.msra.mxu0 0.0
    %157 = vmatpush.msra.mxu0 0.0
    %158 = vmatpush.msra.mxu0 0.0
    %159 = vmatpush.msra.mxu0 0.0
    %160 = vmatpush.msra.mxu0 0.0
    %161 = vmatpush.msra.mxu0 0.0
    %162 = vmatpush.msra.mxu0 0.0
    %163 = vmatpush.msra.mxu0 0.0
    %164 = vmatpush.msra.mxu0 0.0
    %165 = vmatpush.msra.mxu0 0.0
    %166 = vmatpush.msra.mxu0 0.0
    %167 = vmatpush.msra.mxu0 0.0
    %168 = vmatpush.msra.mxu0 %v77
    %169 = vmatpush.msra.mxu0 %v76
    %170 = vmatmul.f32.gmra.mxu0 %v92
    %v171 = vpop.f32.mrf.mxu0
    %v172 = vadd.f32 %v152, %v171
    %173 = vdwg.mxu0
    %v174 = vld [vmem:[%s3] sm:$0xff]
    %v175 = vld [vmem:[%s3 + $0x8] sm:$0xff]
    %v176 = vld [vmem:[%s3 + $0x10] sm:$0xff]
    %v177 = vld [vmem:[%s3 + $0x18] sm:$0xff]
    %v178 = vld [vmem:[%s3 + $0x20] sm:$0xff]
    %v179 = vld [vmem:[%s3 + $0x28] sm:$0xff]
    %v180 = vld [vmem:[%s3 + $0x30] sm:$0xff]
    %v181 = vld [vmem:[%s3 + $0x38] sm:$0xff]
    %v182 = vld [vmem:[%s3 + $0x40] sm:$0xff]
    %v183 = vld [vmem:[%s3 + $0x48] sm:$0xff]
    %v184 = vld [vmem:[%s3 + $0x50] sm:$0xff]
    %v185 = vld [vmem:[%s3 + $0x58] sm:$0xff]
    %v186 = vld [vmem:[%s3 + $0x60] sm:$0xff]
    %v187 = vld [vmem:[%s3 + $0x68] sm:$0xff]
    %v188 = vld [vmem:[%s3 + $0x70] sm:$0xff]
    %v189 = vld [vmem:[%s4] sm:$0x1]
    %v191 = vperm.slane %v189, 0
    %vm193 = vcmask 982016
    %v195 = vsel %vm193, %v172, 0
    %197 = vmatpush.msra.mxu0 0.0
    %198 = vmatpush.msra.mxu0 %v188
    %199 = vmatpush.msra.mxu0 %v187
    %200 = vmatpush.msra.mxu0 %v186
    %201 = vmatpush.msra.mxu0 %v185
    %202 = vmatpush.msra.mxu0 %v184
    %203 = vmatpush.msra.mxu0 %v183
    %204 = vmatpush.msra.mxu0 %v182
    %205 = vmatpush.msra.mxu0 %v181
    %206 = vmatpush.msra.mxu0 %v180
    %207 = vmatpush.msra.mxu0 %v179
    %208 = vmatpush.msra.mxu0 %v178
    %209 = vmatpush.msra.mxu0 %v177
    %210 = vmatpush.msra.mxu0 %v176
    %211 = vmatpush.msra.mxu0 %v175
    %212 = vmatpush.msra.mxu0 %v174
    %213 = vmatmul.f32.gmra.mxu0 %v195
    %v214 = vpop.f32.mrf.mxu0
    %v215 = vadd.f32 %v191, %v214
    %216 = vdwg.mxu0
    %v217 = vld [vmem:[%s5] sm:$0xff]
    %v218 = vld [vmem:[%s5 + $0x8] sm:$0xff]
    %v219 = vld [vmem:[%s5 + $0x10] sm:$0xff]
    %v220 = vld [vmem:[%s5 + $0x18] sm:$0xff]
    %v221 = vld [vmem:[%s5 + $0x20] sm:$0xff]
    %v222 = vld [vmem:[%s5 + $0x28] sm:$0xff]
    %v223 = vld [vmem:[%s5 + $0x30] sm:$0xff]
    %v224 = vld [vmem:[%s5 + $0x38] sm:$0xff]
    %v225 = vld [vmem:[%s5 + $0x40] sm:$0xff]
    %v226 = vld [vmem:[%s5 + $0x48] sm:$0xff]
    %v227 = vld [vmem:[%s5 + $0x50] sm:$0xf]
    %v228 = vld [vmem:[%s6] sm:$0x1]
    %v230 = vperm.slane %v228, 0
    %vm232 = vcmask 687104
    %v234 = vsel %vm232, %v215, 0
    %vm236 = vcmask 1043456
    %v238 = vsel %vm236, %v227, 0
    %240 = vmatpush.msra.mxu0 0.0
    %241 = vmatpush.msra.mxu0 0.0
    %242 = vmatpush.msra.mxu0 0.0
    %243 = vmatpush.msra.mxu0 0.0
    %244 = vmatpush.msra.mxu0 0.0
    %245 = vmatpush.msra.mxu0 %v238
    %246 = vmatpush.msra.mxu0 %v226
    %247 = vmatpush.msra.mxu0 %v225
    %248 = vmatpush.msra.mxu0 %v224
    %249 = vmatpush.msra.mxu0 %v223
    %250 = vmatpush.msra.mxu0 %v222
    %251 = vmatpush.msra.mxu0 %v221
    %252 = vmatpush.msra.mxu0 %v220
    %253 = vmatpush.msra.mxu0 %v219
    %254 = vmatpush.msra.mxu0 %v218
    %255 = vmatpush.msra.mxu0 %v217
    %256 = vmatmul.f32.gmra.mxu0 %v234
    %v257 = vpop.f32.mrf.mxu0
    %v258 = vadd.f32 %v230, %v257
    %259 = vdwg.mxu0
    %vm260 = vcmask 74752
    %261 = vst.msk [vmem:[#allocation2] sm:$0x3] %vm260, %v258
    // Predicated region
    $region30: #{lenet_forward.5} parent=1 // pred_check
      _
    $region31: #{lenet_forward.5} parent=1 // pred_check_branch
      %263 = sbr.rel (0) target = $region33
    $region32: #{lenet_forward.5} parent=1 // pred_region
      %265 = vsyncadd [#allocation3], 0
      %s267 = sshll.u32 [#allocation2], 4
      %s268 = int_to_ptr.vmem [resolvable:$true] %s267
      %s269 = sshll.u32 %s7, 4
      %s270 = int_to_ptr.hbm [resolvable:$true] %s269
      %272 = dma.vmem_to_hbm [thread:$0]  %s268, 32, %s270, [#allocation3]
    $region33: #{lenet_forward.5} parent=1 // pred_fallthru
      _
    // Predicated region
    $region34: #{lenet_forward.5} parent=1 // pred_check
      _
    $region35: #{lenet_forward.5} parent=1 // pred_check_branch
      %274 = sbr.rel (0) target = $region37
    $region36: #{lenet_forward.5} parent=1 // pred_region
      %276 = dma.done [#allocation3], 32
    $region37: #{lenet_forward.5} parent=1 // pred_fallthru
      _
    %277 = vsyncpa [#allocation3], 1

</llo_original>
